<compile_context>
chip_gen: v7x
topology: tpu7x:2x2x1
jax: 0.10.0
libtpu: 0.0.40
codegen_flags: <defaults>
</compile_context>

<pallas_src>
import math

import jax
import jax.numpy as jnp
from jax import lax
from jax.experimental import pallas as pl
from jax.experimental.pallas import tpu as pltpu


# ---------------------------------------------------------------------------
# Stage 1: hidden = SiLU(x @ W1^T + b1) for the three branches, tiled over E.
# ---------------------------------------------------------------------------
def _stage1_kernel(tproj_ref, gproj_ref, pooled_ref,
                   wt1_ref, bt1_ref, wg1_ref, bg1_ref, wp1_ref, bp1_ref,
                   ht_ref, hg_ref, hp_ref):
    def lin_silu(x_ref, w_ref, b_ref):
        # x: (N, in), w: (tk, in)  -> contract last dims (PyTorch (out, in) layout)
        h = lax.dot_general(
            x_ref[...], w_ref[...],
            dimension_numbers=(((1,), (1,)), ((), ())),
            preferred_element_type=jnp.float32)
        h = h + b_ref[...].astype(jnp.float32)
        # SiLU in f32 (VPU/EUP); manual form to keep lowering trivial.
        return h * (1.0 / (1.0 + jnp.exp(-h)))

    ht_ref[...] = lin_silu(tproj_ref, wt1_ref, bt1_ref).astype(ht_ref.dtype)
    hg_ref[...] = lin_silu(gproj_ref, wg1_ref, bg1_ref).astype(hg_ref.dtype)
    hp_ref[...] = lin_silu(pooled_ref, wp1_ref, bp1_ref).astype(hp_ref.dtype)


# ---------------------------------------------------------------------------
# Stage 2: out = h_t @ W2_t^T + h_g @ W2_g^T + h_p @ W2_p^T + (b2_t+b2_g+b2_p)
# grid = (J out-tiles, K inner-tiles); f32 accumulator in scratch.
# ---------------------------------------------------------------------------
def _stage2_kernel(ht_ref, hg_ref, hp_ref,
                   wt2_ref, wg2_ref, wp2_ref, b2_ref,
                   o_ref, acc_ref):
    k = pl.program_id(1)

    @pl.when(k == 0)
    def _():
        acc_ref[...] = jnp.zeros_like(acc_ref)

    def partial_dot(h_ref, w_ref):
        # h: (N, tk), w: (tj, tk) -> (N, tj), contracted on last dims.
        return lax.dot_general(
            h_ref[...], w_ref[...],
            dimension_numbers=(((1,), (1,)), ((), ())),
            preferred_element_type=jnp.float32)

    acc_ref[...] += (partial_dot(ht_ref, wt2_ref)
                     + partial_dot(hg_ref, wg2_ref)
                     + partial_dot(hp_ref, wp2_ref))

    @pl.when(k == pl.num_programs(1) - 1)
    def _():
        o_ref[...] = (acc_ref[...]
                      + b2_ref[...].astype(jnp.float32)).astype(o_ref.dtype)


def _pick_tile(dim, target):
    """Largest lane-aligned (multiple of 128) divisor of `dim` <= target.
    Falls back to the full dimension when none exists."""
    if dim <= target:
        return dim
    t = min(target, dim)
    t -= t % 128
    while t >= 128:
        if dim % t == 0:
            return t
        t -= 128
    return dim


def _sinusoidal_proj_256(t):
    """Timesteps(num_channels=256, flip_sin_to_cos=True, downscale_freq_shift=0)."""
    half = 128
    freqs = jnp.exp(-math.log(10000.0)
                    * jnp.arange(half, dtype=jnp.float32) / half)
    args = t.astype(jnp.float32)[:, None] * freqs[None, :]
    # flip_sin_to_cos=True  ->  [cos | sin]
    return jnp.concatenate([jnp.cos(args), jnp.sin(args)], axis=-1)


def combined_timestep_guidance_text_proj_embeddings(
        timestep, guidance, pooled_projection,
        t_w1, t_b1, t_w2, t_b2,
        g_w1, g_b1, g_w2, g_b2,
        p_w1, p_b1, p_w2, p_b2,
        *, tile_hidden=512, tile_out=512, vmem_limit_bytes=None):
    """
    timestep, guidance   : (N,)
    pooled_projection    : (N, P)
    *_w1 : (E, in)  *_b1 : (E,)   (PyTorch nn.Linear (out, in) layout)
    *_w2 : (E, E)   *_b2 : (E,)
    returns (N, E)

    For production sizes (e.g. E=3072), pass tile_hidden/tile_out tuned per
    generation (v6e: ~2048/512, v7x/v5e: ~1024/256) and set vmem_limit_bytes.
    """
    N = timestep.shape[0]
    E = t_w1.shape[0]
    P = pooled_projection.shape[-1]
    dt = pooled_projection.dtype

    # TODO(synk): the tiny (N, 256) sinusoidal Timesteps projection is computed
    # with plain jnp here; fuse it into the stage-1 kernel once in-kernel
    # sin/cos lowering is confirmed on the target Mosaic version.
    t_proj = _sinusoidal_proj_256(timestep).astype(dt)   # matches .to(pooled.dtype)
    g_proj = _sinusoidal_proj_256(guidance).astype(dt)

    tk = _pick_tile(E, tile_hidden)    # hidden-dim tile (stage 1 & stage 2 inner)
    tj = _pick_tile(E, tile_out)       # output-dim tile (stage 2)
    Kh = E // tk
    J = E // tj

    b1_t = t_b1.reshape(1, E)
    b1_g = g_b1.reshape(1, E)
    b1_p = p_b1.reshape(1, E)
    b2_sum = (t_b2 + g_b2 + p_b2).reshape(1, E)   # added once in the epilogue

    compiler_params = pltpu.CompilerParams(
        dimension_semantics=("parallel",),
        vmem_limit_bytes=vmem_limit_bytes)

    # ---- Stage 1: the three SiLU hiddens ---------------------------------
    ht, hg, hp = pl.pallas_call(
        _stage1_kernel,
        out_shape=(jax.ShapeDtypeStruct((N, E), dt),
                   jax.ShapeDtypeStruct((N, E), dt),
                   jax.ShapeDtypeStruct((N, E), dt)),
        grid_spec=pltpu.PrefetchScalarGridSpec(
            num_scalar_prefetch=0,
            grid=(Kh,),
            in_specs=[
                pl.BlockSpec((N, 256), lambda k: (0, 0)),   # t_proj
                pl.BlockSpec((N, 256), lambda k: (0, 0)),   # g_proj
                pl.BlockSpec((N, P),   lambda k: (0, 0)),   # pooled
                pl.BlockSpec((tk, 256), lambda k: (k, 0)),  # t_w1
                pl.BlockSpec((1, tk),   lambda k: (0, k)),  # t_b1
                pl.BlockSpec((tk, 256), lambda k: (k, 0)),  # g_w1
                pl.BlockSpec((1, tk),   lambda k: (0, k)),  # g_b1
                pl.BlockSpec((tk, P),   lambda k: (k, 0)),  # p_w1
                pl.BlockSpec((1, tk),   lambda k: (0, k)),  # p_b1
            ],
            out_specs=(
                pl.BlockSpec((N, tk), lambda k: (0, k)),
                pl.BlockSpec((N, tk), lambda k: (0, k)),
                pl.BlockSpec((N, tk), lambda k: (0, k)),
            ),
        ),
        compiler_params=compiler_params,
    )(t_proj, g_proj, pooled_projection,
      t_w1, b1_t, g_w1, b1_g, p_w1, b1_p)

    # ---- Stage 2: second linears + final sums, accumulated over k ---------
    out = pl.pallas_call(
        _stage2_kernel,
        out_shape=jax.ShapeDtypeStruct((N, E), dt),
        grid_spec=pltpu.PrefetchScalarGridSpec(
            num_scalar_prefetch=0,
            grid=(J, Kh),
            in_specs=[
                pl.BlockSpec((N, tk),  lambda j, k: (0, k)),   # h_t
                pl.BlockSpec((N, tk),  lambda j, k: (0, k)),   # h_g
                pl.BlockSpec((N, tk),  lambda j, k: (0, k)),   # h_p
                pl.BlockSpec((tj, tk), lambda j, k: (j, k)),   # t_w2
                pl.BlockSpec((tj, tk), lambda j, k: (j, k)),   # g_w2
                pl.BlockSpec((tj, tk), lambda j, k: (j, k)),   # p_w2
                pl.BlockSpec((1, tj),  lambda j, k: (0, j)),   # b2 (summed)
            ],
            out_specs=pl.BlockSpec((N, tj), lambda j, k: (0, j)),
            scratch_shapes=[pltpu.VMEM((N, tj), jnp.float32)],
        ),
        compiler_params=pltpu.CompilerParams(
            dimension_semantics=("parallel", "arbitrary"),
            vmem_limit_bytes=vmem_limit_bytes),
    )(ht, hg, hp, t_w2, g_w2, p_w2, b2_sum)

    return out


# ---------------------------------------------------------------------------
# Pure-JAX reference
# ---------------------------------------------------------------------------
def _reference(timestep, guidance, pooled,
               t_w1, t_b1, t_w2, t_b2,
               g_w1, g_b1, g_w2, g_b2,
               p_w1, p_b1, p_w2, p_b2):
    hp = jax.lax.Precision.HIGHEST

    def mlp(x, w1, b1, w2, b2):
        h = jnp.dot(x, w1.T, precision=hp) + b1
        h = jax.nn.silu(h)
        return jnp.dot(h, w2.T, precision=hp) + b2

    dt = pooled.dtype
    t_emb = mlp(_sinusoidal_proj_256(timestep).astype(dt), t_w1, t_b1, t_w2, t_b2)
    g_emb = mlp(_sinusoidal_proj_256(guidance).astype(dt), g_w1, g_b1, g_w2, g_b2)
    p_emb = mlp(pooled, p_w1, p_b1, p_w2, p_b2)
    return (t_emb + g_emb) + p_emb


if __name__ == "__main__":
    N = 2                     # batch of timesteps
    embedding_dim = 256       # E
    pooled_projection_dim = 128

    key = jax.random.PRNGKey(0)
    ks = jax.random.split(key, 16)

    timestep = jax.random.uniform(ks[0], (N,), minval=0.0, maxval=1000.0,
                                  dtype=jnp.float32)
    guidance = jax.random.uniform(ks[1], (N,), minval=0.0, maxval=1000.0,
                                  dtype=jnp.float32)
    pooled = jax.random.normal(ks[2], (N, pooled_projection_dim),
                               dtype=jnp.float32)

    def lin(kw, kb, out_f, in_f):
        w = jax.random.normal(kw, (out_f, in_f), dtype=jnp.float32) * 0.02
        b = jax.random.normal(kb, (out_f,), dtype=jnp.float32) * 0.02
        return w, b

    t_w1, t_b1 = lin(ks[3], ks[4], embedding_dim, 256)
    t_w2, t_b2 = lin(ks[5], ks[6], embedding_dim, embedding_dim)
    g_w1, g_b1 = lin(ks[7], ks[8], embedding_dim, 256)
    g_w2, g_b2 = lin(ks[9], ks[10], embedding_dim, embedding_dim)
    p_w1, p_b1 = lin(ks[11], ks[12], embedding_dim, pooled_projection_dim)
    p_w2, p_b2 = lin(ks[13], ks[14], embedding_dim, embedding_dim)

    y = combined_timestep_guidance_text_proj_embeddings(
        timestep, guidance, pooled,
        t_w1, t_b1, t_w2, t_b2,
        g_w1, g_b1, g_w2, g_b2,
        p_w1, p_b1, p_w2, p_b2,
        tile_hidden=128, tile_out=128)   # small tiles -> multi-step grids
    y = jax.block_until_ready(y)

    y_ref = _reference(
        timestep, guidance, pooled,
        t_w1, t_b1, t_w2, t_b2,
        g_w1, g_b1, g_w2, g_b2,
        p_w1, p_b1, p_w2, p_b2)

    assert y.shape == (N, embedding_dim)
    assert jnp.allclose(y, y_ref, atol=1e-3, rtol=1e-3), float(
        jnp.max(jnp.abs(y - y_ref)))

    print("KERNEL_OK")
</pallas_src>

<mosaic_0001>
module attributes {stable_mosaic.version = 11 : i64} {
  func.func @_stage1_kernel(%arg0: i32, %arg1: memref<2x256xf32, #tpu.memory_space<vmem>>, %arg2: memref<2x256xf32, #tpu.memory_space<vmem>>, %arg3: memref<2x128xf32, #tpu.memory_space<vmem>>, %arg4: memref<128x256xf32, #tpu.memory_space<vmem>>, %arg5: memref<1x128xf32, #tpu.memory_space<vmem>>, %arg6: memref<128x256xf32, #tpu.memory_space<vmem>>, %arg7: memref<1x128xf32, #tpu.memory_space<vmem>>, %arg8: memref<128x128xf32, #tpu.memory_space<vmem>>, %arg9: memref<1x128xf32, #tpu.memory_space<vmem>>, %arg10: memref<2x128xf32, #tpu.memory_space<vmem>>, %arg11: memref<2x128xf32, #tpu.memory_space<vmem>>, %arg12: memref<2x128xf32, #tpu.memory_space<vmem>>) attributes {dimension_semantics = [#tpu.dimension_semantics<parallel>], iteration_bounds = array<i64: 2>, scalar_prefetch = 0 : i64, scratch_operands = 0 : i64, tpu.core_type = #tpu.core_type<tc>, window_params = [{pipeline_mode = #tpu.pipeline_mode<synchronous>, transform_indices = @transform_0, window_bounds = array<i64: 2, 256>}, {pipeline_mode = #tpu.pipeline_mode<synchronous>, transform_indices = @transform_1, window_bounds = array<i64: 2, 256>}, {pipeline_mode = #tpu.pipeline_mode<synchronous>, transform_indices = @transform_2, window_bounds = array<i64: 2, 128>}, {transform_indices = @transform_3, window_bounds = array<i64: 128, 256>}, {transform_indices = @transform_4, window_bounds = array<i64: 1, 128>}, {transform_indices = @transform_5, window_bounds = array<i64: 128, 256>}, {transform_indices = @transform_6, window_bounds = array<i64: 1, 128>}, {transform_indices = @transform_7, window_bounds = array<i64: 128, 128>}, {transform_indices = @transform_8, window_bounds = array<i64: 1, 128>}, {transform_indices = @transform_9, window_bounds = array<i64: 2, 128>}, {transform_indices = @transform_10, window_bounds = array<i64: 2, 128>}, {transform_indices = @transform_11, window_bounds = array<i64: 2, 128>}]} {
    %c0 = arith.constant 0 : index
    %c0_0 = arith.constant 0 : index
    %0 = vector.load %arg1[%c0, %c0_0] : memref<2x256xf32, #tpu.memory_space<vmem>>, vector<2x256xf32>
    %c0_1 = arith.constant 0 : index
    %c0_2 = arith.constant 0 : index
    %1 = vector.load %arg4[%c0_1, %c0_2] : memref<128x256xf32, #tpu.memory_space<vmem>>, vector<128x256xf32>
    %cst = arith.constant dense<0.000000e+00> : vector<2x128xf32>
    %2 = tpu.matmul %0, %1, %cst {dimension_numbers = #tpu.dot_dimension_numbers<[1], [1], [0], [0], [0, 0, 1, 0], [], []>} : vector<2x256xf32>, vector<128x256xf32>, vector<2x128xf32> -> vector<2x128xf32>
    %c0_3 = arith.constant 0 : index
    %c0_4 = arith.constant 0 : index
    %3 = vector.load %arg5[%c0_3, %c0_4] : memref<1x128xf32, #tpu.memory_space<vmem>>, vector<1x128xf32>
    %4 = vector.broadcast %3 : vector<1x128xf32> to vector<2x128xf32>
    %5 = arith.addf %2, %4 : vector<2x128xf32>
    %cst_5 = arith.constant 0.000000e+00 : f32
    %6 = vector.broadcast %cst_5 : f32 to vector<2x128xf32>
    %7 = arith.subf %6, %5 : vector<2x128xf32>
    %8 = math.exp %7 : vector<2x128xf32>
    %cst_6 = arith.constant 1.000000e+00 : f32
    %9 = vector.broadcast %cst_6 : f32 to vector<2x128xf32>
    %10 = arith.addf %9, %8 : vector<2x128xf32>
    %cst_7 = arith.constant 1.000000e+00 : f32
    %11 = vector.broadcast %cst_7 : f32 to vector<2x128xf32>
    %12 = arith.divf %11, %10 : vector<2x128xf32>
    %13 = arith.mulf %5, %12 : vector<2x128xf32>
    %c0_8 = arith.constant 0 : index
    %c0_9 = arith.constant 0 : index
    %14 = vector.load %arg10[%c0_8, %c0_9] : memref<2x128xf32, #tpu.memory_space<vmem>>, vector<2x128xf32>
    tpu.vector_store %arg10[%c0_8, %c0_9], %13 {strides = array<i32>} : memref<2x128xf32, #tpu.memory_space<vmem>>, vector<2x128xf32>,
    %c0_10 = arith.constant 0 : index
    %c0_11 = arith.constant 0 : index
    %15 = vector.load %arg2[%c0_10, %c0_11] : memref<2x256xf32, #tpu.memory_space<vmem>>, vector<2x256xf32>
    %c0_12 = arith.constant 0 : index
    %c0_13 = arith.constant 0 : index
    %16 = vector.load %arg6[%c0_12, %c0_13] : memref<128x256xf32, #tpu.memory_space<vmem>>, vector<128x256xf32>
    %cst_14 = arith.constant dense<0.000000e+00> : vector<2x128xf32>
    %17 = tpu.matmul %15, %16, %cst_14 {dimension_numbers = #tpu.dot_dimension_numbers<[1], [1], [0], [0], [0, 0, 1, 0], [], []>} : vector<2x256xf32>, vector<128x256xf32>, vector<2x128xf32> -> vector<2x128xf32>
    %c0_15 = arith.constant 0 : index
    %c0_16 = arith.constant 0 : index
    %18 = vector.load %arg7[%c0_15, %c0_16] : memref<1x128xf32, #tpu.memory_space<vmem>>, vector<1x128xf32>
    %19 = vector.broadcast %18 : vector<1x128xf32> to vector<2x128xf32>
    %20 = arith.addf %17, %19 : vector<2x128xf32>
    %cst_17 = arith.constant 0.000000e+00 : f32
    %21 = vector.broadcast %cst_17 : f32 to vector<2x128xf32>
    %22 = arith.subf %21, %20 : vector<2x128xf32>
    %23 = math.exp %22 : vector<2x128xf32>
    %cst_18 = arith.constant 1.000000e+00 : f32
    %24 = vector.broadcast %cst_18 : f32 to vector<2x128xf32>
    %25 = arith.addf %24, %23 : vector<2x128xf32>
    %cst_19 = arith.constant 1.000000e+00 : f32
    %26 = vector.broadcast %cst_19 : f32 to vector<2x128xf32>
    %27 = arith.divf %26, %25 : vector<2x128xf32>
    %28 = arith.mulf %20, %27 : vector<2x128xf32>
    %c0_20 = arith.constant 0 : index
    %c0_21 = arith.constant 0 : index
    %29 = vector.load %arg11[%c0_20, %c0_21] : memref<2x128xf32, #tpu.memory_space<vmem>>, vector<2x128xf32>
    tpu.vector_store %arg11[%c0_20, %c0_21], %28 {strides = array<i32>} : memref<2x128xf32, #tpu.memory_space<vmem>>, vector<2x128xf32>,
    %c0_22 = arith.constant 0 : index
    %c0_23 = arith.constant 0 : index
    %30 = vector.load %arg3[%c0_22, %c0_23] : memref<2x128xf32, #tpu.memory_space<vmem>>, vector<2x128xf32>
    %c0_24 = arith.constant 0 : index
    %c0_25 = arith.constant 0 : index
    %31 = vector.load %arg8[%c0_24, %c0_25] : memref<128x128xf32, #tpu.memory_space<vmem>>, vector<128x128xf32>
    %cst_26 = arith.constant dense<0.000000e+00> : vector<2x128xf32>
    %32 = tpu.matmul %30, %31, %cst_26 {dimension_numbers = #tpu.dot_dimension_numbers<[1], [1], [0], [0], [0, 0, 1, 0], [], []>} : vector<2x128xf32>, vector<128x128xf32>, vector<2x128xf32> -> vector<2x128xf32>
    %c0_27 = arith.constant 0 : index
    %c0_28 = arith.constant 0 : index
    %33 = vector.load %arg9[%c0_27, %c0_28] : memref<1x128xf32, #tpu.memory_space<vmem>>, vector<1x128xf32>
    %34 = vector.broadcast %33 : vector<1x128xf32> to vector<2x128xf32>
    %35 = arith.addf %32, %34 : vector<2x128xf32>
    %cst_29 = arith.constant 0.000000e+00 : f32
    %36 = vector.broadcast %cst_29 : f32 to vector<2x128xf32>
    %37 = arith.subf %36, %35 : vector<2x128xf32>
    %38 = math.exp %37 : vector<2x128xf32>
    %cst_30 = arith.constant 1.000000e+00 : f32
    %39 = vector.broadcast %cst_30 : f32 to vector<2x128xf32>
    %40 = arith.addf %39, %38 : vector<2x128xf32>
    %cst_31 = arith.constant 1.000000e+00 : f32
    %41 = vector.broadcast %cst_31 : f32 to vector<2x128xf32>
    %42 = arith.divf %41, %40 : vector<2x128xf32>
    %43 = arith.mulf %35, %42 : vector<2x128xf32>
    %c0_32 = arith.constant 0 : index
    %c0_33 = arith.constant 0 : index
    %44 = vector.load %arg12[%c0_32, %c0_33] : memref<2x128xf32, #tpu.memory_space<vmem>>, vector<2x128xf32>
    tpu.vector_store %arg12[%c0_32, %c0_33], %43 {strides = array<i32>} : memref<2x128xf32, #tpu.memory_space<vmem>>, vector<2x128xf32>,
    return
  }
  func.func @transform_0(%arg0: i32) -> (i32, i32) {
    %c0_i32 = arith.constant 0 : i32
    %c0_i32_0 = arith.constant 0 : i32
    %c0_i32_1 = arith.constant 0 : i32
    return %c0_i32, %c0_i32_0 : i32, i32
  }
  func.func @transform_1(%arg0: i32) -> (i32, i32) {
    %c0_i32 = arith.constant 0 : i32
    %c0_i32_0 = arith.constant 0 : i32
    %c0_i32_1 = arith.constant 0 : i32
    return %c0_i32, %c0_i32_0 : i32, i32
  }
  func.func @transform_2(%arg0: i32) -> (i32, i32) {
    %c0_i32 = arith.constant 0 : i32
    %c0_i32_0 = arith.constant 0 : i32
    %c0_i32_1 = arith.constant 0 : i32
    return %c0_i32, %c0_i32_0 : i32, i32
  }
  func.func @transform_3(%arg0: i32) -> (i32, i32) {
    %c0_i32 = arith.constant 0 : i32
    %c0_i32_0 = arith.constant 0 : i32
    return %arg0, %c0_i32 : i32, i32
  }
  func.func @transform_4(%arg0: i32) -> (i32, i32) {
    %c0_i32 = arith.constant 0 : i32
    %c0_i32_0 = arith.constant 0 : i32
    return %c0_i32, %arg0 : i32, i32
  }
  func.func @transform_5(%arg0: i32) -> (i32, i32) {
    %c0_i32 = arith.constant 0 : i32
    %c0_i32_0 = arith.constant 0 : i32
    return %arg0, %c0_i32 : i32, i32
  }
  func.func @transform_6(%arg0: i32) -> (i32, i32) {
    %c0_i32 = arith.constant 0 : i32
    %c0_i32_0 = arith.constant 0 : i32
    return %c0_i32, %arg0 : i32, i32
  }
  func.func @transform_7(%arg0: i32) -> (i32, i32) {
    %c0_i32 = arith.constant 0 : i32
    %c0_i32_0 = arith.constant 0 : i32
    return %arg0, %c0_i32 : i32, i32
  }
  func.func @transform_8(%arg0: i32) -> (i32, i32) {
    %c0_i32 = arith.constant 0 : i32
    %c0_i32_0 = arith.constant 0 : i32
    return %c0_i32, %arg0 : i32, i32
  }
  func.func @transform_9(%arg0: i32) -> (i32, i32) {
    %c0_i32 = arith.constant 0 : i32
    %c0_i32_0 = arith.constant 0 : i32
    return %c0_i32, %arg0 : i32, i32
  }
  func.func @transform_10(%arg0: i32) -> (i32, i32) {
    %c0_i32 = arith.constant 0 : i32
    %c0_i32_0 = arith.constant 0 : i32
    return %c0_i32, %arg0 : i32, i32
  }
  func.func @transform_11(%arg0: i32) -> (i32, i32) {
    %c0_i32 = arith.constant 0 : i32
    %c0_i32_0 = arith.constant 0 : i32
    return %c0_i32, %arg0 : i32, i32
  }
}

</mosaic_0001>

<llo_original>
// kernel: tpu_custom_call.1
$region0: #{tpu_custom_call.1}
  #allocation0 [shape = 'u32[]', space=smem, size = 0x4, offset = 0x4, fixed_abs, tag = 'smem constant byte address 0x4 - core index']
  #allocation1 [shape = 'u32[144,128]{1,0:T(1,128)}', space=vmem, size = 0x12000, scoped, tag = 'internal scratch']
  %s0 = inlined_call_operand.hbm [shape: f32[2,256], index: 0, kind: input, shape index: {}]
  %s1 = inlined_call_operand.hbm [shape: f32[2,256], index: 1, kind: input, shape index: {}]
  %s2 = inlined_call_operand.vmem [shape: f32[2,128], index: 2, kind: input, shape index: {}]
  %s3 = inlined_call_operand.hbm [shape: f32[256,256], index: 3, kind: input, shape index: {}]
  %s4 = inlined_call_operand.vmem [shape: f32[1,256], index: 4, kind: input, shape index: {}]
  %s5 = inlined_call_operand.hbm [shape: f32[256,256], index: 5, kind: input, shape index: {}]
  %s6 = inlined_call_operand.vmem [shape: f32[1,256], index: 6, kind: input, shape index: {}]
  %s7 = inlined_call_operand.hbm [shape: f32[256,128], index: 7, kind: input, shape index: {}]
  %s8 = inlined_call_operand.vmem [shape: f32[1,256], index: 8, kind: input, shape index: {}]
  %s9 = inlined_call_operand.hbm [shape: f32[2,256], index: 9, kind: output, shape index: {0}]
  %s10 = inlined_call_operand.hbm [shape: f32[2,256], index: 10, kind: output, shape index: {1}]
  %s11 = inlined_call_operand.hbm [shape: f32[2,256], index: 11, kind: output, shape index: {2}]
  %12 = xla_tuple %s9, %s10, %s11
  %s13 = sld [smem:[#allocation0]]
  $region105: #{tpu_custom_call.1} parent=0
    _
  %s15 = ssub.s32 1, %s13
  %s16 = scalar_select 0, %s15, %s13
  $region1: #{tpu_custom_call.1} parent=0
    #allocation2 [shape = 'u8[2048]{0}', space=vmem, size = 0x800, scoped, tag = 'input window, operand 0, single buffered']
    #allocation3 [shape = 's32[2]{0}', space=sflag, size = 0x8, scoped, tag = 'scoped memory for tpu_custom_call.1']
    #allocation4 [shape = 's32[2]{0}', space=sflag, size = 0x8, scoped, tag = 'scoped memory for tpu_custom_call.1']
    #allocation5 [shape = 'u8[2048]{0}', space=vmem, size = 0x800, scoped, tag = 'input window, operand 1, single buffered']
    #allocation6 [shape = 's32[1]{0}', space=sflag, size = 0x4, scoped, tag = 'scoped memory for tpu_custom_call.1']
    #allocation7 [shape = 'u8[262144]{0}', space=vmem, size = 0x40000, scoped, tag = 'input window, operand 3']
    #allocation8 [shape = 'u8[262144]{0}', space=vmem, size = 0x40000, scoped, tag = 'input window, operand 5']
    #allocation9 [shape = 'u8[131072]{0}', space=vmem, size = 0x20000, scoped, tag = 'input window, operand 7']
    #allocation10 [shape = 'u8[2048]{0}', space=vmem, size = 0x800, scoped, tag = 'output window, operand 0']
    #allocation11 [shape = 'u8[2048]{0}', space=vmem, size = 0x800, scoped, tag = 'output window, operand 1']
    #allocation12 [shape = 's32[2]{0}', space=sflag, size = 0x8, scoped, tag = 'scoped memory for tpu_custom_call.1']
    #allocation13 [shape = 'u8[2048]{0}', space=vmem, size = 0x800, scoped, tag = 'output window, operand 2']
    %17 = vsyncpa [#allocation3], 0
    %18 = vsyncpa [#allocation6], 0
    %19 = vsyncpa [#allocation4], 0
    %s20 = scalar_lea.sflag [#allocation4], 1
    %21 = vsyncpa %s20, 0
    %22 = vsyncpa [#allocation12], 0
    %s23 = scalar_lea.sflag [#allocation12], 1
    %24 = vsyncpa %s23, 0
    loop: start=0, step=1, limit=4
    $region2: #{tpu_custom_call.1} parent=1 // loop_pre_header
      _
    $region3: #{tpu_custom_call.1} parent=1 // loop_header
      %s26 = sphi 0, %s30
      %p27 = scmp.ge.s32.totalorder %s26, 4
      %s34 = sphi 0, %s34
      %s36 = sphi 0, %s34
      %s37 = sphi 0, %s36
      %s51 = sphi 0, %s37
      %s55 = sphi 0, %s55
      %s57 = sphi 0, %s55
      %s58 = sphi 0, %s57
      %s72 = sphi 0, %s58
      %s76 = sphi 0, %s76
      %s78 = sphi 0, %s76
      %s79 = sphi 0, %s78
      %s93 = sphi 0, %s79
      %s99 = sphi 0, %s101
      %s102 = sphi 0, %s99
      %s103 = sphi 0, %s102
      %s119 = sphi 0, %s103
      %s125 = sphi 0, %s127
      %s128 = sphi 0, %s125
      %s129 = sphi 0, %s128
      %s145 = sphi 0, %s129
      %s151 = sphi 0, %s153
      %s154 = sphi 0, %s151
      %s155 = sphi 0, %s154
      %s171 = sphi 0, %s155
      %s177 = sphi 0, %s179
      %s180 = sphi 0, %s177
      %s181 = sphi 0, %s180
      %s197 = sphi 0, %s181
      %s203 = sphi 0, %s205
      %s206 = sphi 0, %s203
      %s207 = sphi 0, %s206
      %s223 = sphi 0, %s207
      %s229 = sphi 0, %s231
      %s232 = sphi 0, %s229
      %s233 = sphi 0, %s232
      %s249 = sphi 0, %s233
      %s255 = sphi 0, %s257
      %s258 = sphi 0, %s255
      %s259 = sphi 0, %s258
      %s275 = sphi 0, %s259
      %s281 = sphi 0, %s283
      %s284 = sphi 0, %s281
      %s285 = sphi 0, %s284
      %s301 = sphi 0, %s285
      %s307 = sphi 0, %s309
      %s310 = sphi 0, %s307
      %s311 = sphi 0, %s310
      %s327 = sphi 0, %s311
    $region4: #{tpu_custom_call.1} parent=1 // loop_header_branch
      %29 = sbr.rel (%p27) target = $region8
    $region5: #{tpu_custom_call.1} parent=1 // loop_body
      %s31 = ssub.s32 %s26, 1
      %s32 = ssub.s32 %s26, 2
      %s33 = sadd.s32 %s26, 1
      %s35 = sadd.s32 %s34, 1
      %p38 = scmp.eq.s32.totalorder %s26, 1
      %p39 = scmp.ne.s32.totalorder %s34, %s36
      %p40 = scmp.eq.s32.totalorder %s26, 0
      %p41 = por %p39, %p40
      %p42 = scmp.ne.s32.totalorder %s34, %s36
      %p43 = scmp.eq.s32.totalorder %s31, 1
      %p44 = por %p42, %p43
      %p45 = scmp.ne.s32.totalorder %s36, %s37
      %p46 = scmp.eq.s32.totalorder %s31, 0
      %p47 = por %p45, %p46
      %p48 = scmp.ne.s32.totalorder %s36, %s37
      %p49 = scmp.eq.s32.totalorder %s32, 1
      %p50 = por %p48, %p49
      %p52 = scmp.ne.s32.totalorder %s37, %s51
      %p53 = scmp.eq.s32.totalorder %s32, 0
      %p54 = por %p52, %p53
      %s56 = sadd.s32 %s55, 1
      %p59 = scmp.eq.s32.totalorder %s26, 1
      %p60 = scmp.ne.s32.totalorder %s55, %s57
      %p61 = scmp.eq.s32.totalorder %s26, 0
      %p62 = por %p60, %p61
      %p63 = scmp.ne.s32.totalorder %s55, %s57
      %p64 = scmp.eq.s32.totalorder %s31, 1
      %p65 = por %p63, %p64
      %p66 = scmp.ne.s32.totalorder %s57, %s58
      %p67 = scmp.eq.s32.totalorder %s31, 0
      %p68 = por %p66, %p67
      %p69 = scmp.ne.s32.totalorder %s57, %s58
      %p70 = scmp.eq.s32.totalorder %s32, 1
      %p71 = por %p69, %p70
      %p73 = scmp.ne.s32.totalorder %s58, %s72
      %p74 = scmp.eq.s32.totalorder %s32, 0
      %p75 = por %p73, %p74
      %s77 = sadd.s32 %s76, 1
      %p80 = scmp.eq.s32.totalorder %s26, 1
      %p81 = scmp.ne.s32.totalorder %s76, %s78
      %p82 = scmp.eq.s32.totalorder %s26, 0
      %p83 = por %p81, %p82
      %p84 = scmp.ne.s32.totalorder %s76, %s78
      %p85 = scmp.eq.s32.totalorder %s31, 1
      %p86 = por %p84, %p85
      %p87 = scmp.ne.s32.totalorder %s78, %s79
      %p88 = scmp.eq.s32.totalorder %s31, 0
      %p89 = por %p87, %p88
      %p90 = scmp.ne.s32.totalorder %s78, %s79
      %p91 = scmp.eq.s32.totalorder %s32, 1
      %p92 = por %p90, %p91
      %p94 = scmp.ne.s32.totalorder %s79, %s93
      %p95 = scmp.eq.s32.totalorder %s32, 0
      %p96 = por %p94, %p95
      %s97 = ssub.s32 %s26, %s33
      %p98 = scmp.eq.s32.totalorder %s97, 0
      %s100 = sadd.s32 %s99, 1
      %s101 = scalar_select %p98, %s99, %s100
      %p104 = pneg %p98
      %p105 = scmp.eq.s32.totalorder %s26, 1
      %p106 = por %p104, %p105
      %p107 = scmp.ne.s32.totalorder %s99, %s102
      %p108 = scmp.eq.s32.totalorder %s26, 0
      %p109 = por %p107, %p108
      %p110 = scmp.ne.s32.totalorder %s99, %s102
      %p111 = scmp.eq.s32.totalorder %s31, 1
      %p112 = por %p110, %p111
      %p113 = scmp.ne.s32.totalorder %s102, %s103
      %p114 = scmp.eq.s32.totalorder %s31, 0
      %p115 = por %p113, %p114
      %p116 = scmp.ne.s32.totalorder %s102, %s103
      %p117 = scmp.eq.s32.totalorder %s32, 1
      %p118 = por %p116, %p117
      %p120 = scmp.ne.s32.totalorder %s103, %s119
      %p121 = scmp.eq.s32.totalorder %s32, 0
      %p122 = por %p120, %p121
      %s123 = ssub.s32 %s26, %s33
      %p124 = scmp.eq.s32.totalorder %s123, 0
      %s126 = sadd.s32 %s125, 1
      %s127 = scalar_select %p124, %s125, %s126
      %p130 = pneg %p124
      %p131 = scmp.eq.s32.totalorder %s26, 1
      %p132 = por %p130, %p131
      %p133 = scmp.ne.s32.totalorder %s125, %s128
      %p134 = scmp.eq.s32.totalorder %s26, 0
      %p135 = por %p133, %p134
      %p136 = scmp.ne.s32.totalorder %s125, %s128
      %p137 = scmp.eq.s32.totalorder %s31, 1
      %p138 = por %p136, %p137
      %p139 = scmp.ne.s32.totalorder %s128, %s129
      %p140 = scmp.eq.s32.totalorder %s31, 0
      %p141 = por %p139, %p140
      %p142 = scmp.ne.s32.totalorder %s128, %s129
      %p143 = scmp.eq.s32.totalorder %s32, 1
      %p144 = por %p142, %p143
      %p146 = scmp.ne.s32.totalorder %s129, %s145
      %p147 = scmp.eq.s32.totalorder %s32, 0
      %p148 = por %p146, %p147
      %s149 = ssub.s32 %s26, %s33
      %p150 = scmp.eq.s32.totalorder %s149, 0
      %s152 = sadd.s32 %s151, 1
      %s153 = scalar_select %p150, %s151, %s152
      %p156 = pneg %p150
      %p157 = scmp.eq.s32.totalorder %s26, 1
      %p158 = por %p156, %p157
      %p159 = scmp.ne.s32.totalorder %s151, %s154
      %p160 = scmp.eq.s32.totalorder %s26, 0
      %p161 = por %p159, %p160
      %p162 = scmp.ne.s32.totalorder %s151, %s154
      %p163 = scmp.eq.s32.totalorder %s31, 1
      %p164 = por %p162, %p163
      %p165 = scmp.ne.s32.totalorder %s154, %s155
      %p166 = scmp.eq.s32.totalorder %s31, 0
      %p167 = por %p165, %p166
      %p168 = scmp.ne.s32.totalorder %s154, %s155
      %p169 = scmp.eq.s32.totalorder %s32, 1
      %p170 = por %p168, %p169
      %p172 = scmp.ne.s32.totalorder %s155, %s171
      %p173 = scmp.eq.s32.totalorder %s32, 0
      %p174 = por %p172, %p173
      %s175 = ssub.s32 %s26, %s33
      %p176 = scmp.eq.s32.totalorder %s175, 0
      %s178 = sadd.s32 %s177, 1
      %s179 = scalar_select %p176, %s177, %s178
      %p182 = pneg %p176
      %p183 = scmp.eq.s32.totalorder %s26, 1
      %p184 = por %p182, %p183
      %p185 = scmp.ne.s32.totalorder %s177, %s180
      %p186 = scmp.eq.s32.totalorder %s26, 0
      %p187 = por %p185, %p186
      %p188 = scmp.ne.s32.totalorder %s177, %s180
      %p189 = scmp.eq.s32.totalorder %s31, 1
      %p190 = por %p188, %p189
      %p191 = scmp.ne.s32.totalorder %s180, %s181
      %p192 = scmp.eq.s32.totalorder %s31, 0
      %p193 = por %p191, %p192
      %p194 = scmp.ne.s32.totalorder %s180, %s181
      %p195 = scmp.eq.s32.totalorder %s32, 1
      %p196 = por %p194, %p195
      %p198 = scmp.ne.s32.totalorder %s181, %s197
      %p199 = scmp.eq.s32.totalorder %s32, 0
      %p200 = por %p198, %p199
      %s201 = ssub.s32 %s26, %s33
      %p202 = scmp.eq.s32.totalorder %s201, 0
      %s204 = sadd.s32 %s203, 1
      %s205 = scalar_select %p202, %s203, %s204
      %p208 = pneg %p202
      %p209 = scmp.eq.s32.totalorder %s26, 1
      %p210 = por %p208, %p209
      %p211 = scmp.ne.s32.totalorder %s203, %s206
      %p212 = scmp.eq.s32.totalorder %s26, 0
      %p213 = por %p211, %p212
      %p214 = scmp.ne.s32.totalorder %s203, %s206
      %p215 = scmp.eq.s32.totalorder %s31, 1
      %p216 = por %p214, %p215
      %p217 = scmp.ne.s32.totalorder %s206, %s207
      %p218 = scmp.eq.s32.totalorder %s31, 0
      %p219 = por %p217, %p218
      %p220 = scmp.ne.s32.totalorder %s206, %s207
      %p221 = scmp.eq.s32.totalorder %s32, 1
      %p222 = por %p220, %p221
      %p224 = scmp.ne.s32.totalorder %s207, %s223
      %p225 = scmp.eq.s32.totalorder %s32, 0
      %p226 = por %p224, %p225
      %s227 = ssub.s32 %s26, %s33
      %p228 = scmp.eq.s32.totalorder %s227, 0
      %s230 = sadd.s32 %s229, 1
      %s231 = scalar_select %p228, %s229, %s230
      %p234 = pneg %p228
      %p235 = scmp.eq.s32.totalorder %s26, 1
      %p236 = por %p234, %p235
      %p237 = scmp.ne.s32.totalorder %s229, %s232
      %p238 = scmp.eq.s32.totalorder %s26, 0
      %p239 = por %p237, %p238
      %p240 = scmp.ne.s32.totalorder %s229, %s232
      %p241 = scmp.eq.s32.totalorder %s31, 1
      %p242 = por %p240, %p241
      %p243 = scmp.ne.s32.totalorder %s232, %s233
      %p244 = scmp.eq.s32.totalorder %s31, 0
      %p245 = por %p243, %p244
      %p246 = scmp.ne.s32.totalorder %s232, %s233
      %p247 = scmp.eq.s32.totalorder %s32, 1
      %p248 = por %p246, %p247
      %p250 = scmp.ne.s32.totalorder %s233, %s249
      %p251 = scmp.eq.s32.totalorder %s32, 0
      %p252 = por %p250, %p251
      %s253 = ssub.s32 %s26, %s33
      %p254 = scmp.eq.s32.totalorder %s253, 0
      %s256 = sadd.s32 %s255, 1
      %s257 = scalar_select %p254, %s255, %s256
      %p260 = pneg %p254
      %p261 = scmp.eq.s32.totalorder %s26, 1
      %p262 = por %p260, %p261
      %p263 = scmp.ne.s32.totalorder %s255, %s258
      %p264 = scmp.eq.s32.totalorder %s26, 0
      %p265 = por %p263, %p264
      %p266 = scmp.ne.s32.totalorder %s255, %s258
      %p267 = scmp.eq.s32.totalorder %s31, 1
      %p268 = por %p266, %p267
      %p269 = scmp.ne.s32.totalorder %s258, %s259
      %p270 = scmp.eq.s32.totalorder %s31, 0
      %p271 = por %p269, %p270
      %p272 = scmp.ne.s32.totalorder %s258, %s259
      %p273 = scmp.eq.s32.totalorder %s32, 1
      %p274 = por %p272, %p273
      %p276 = scmp.ne.s32.totalorder %s259, %s275
      %p277 = scmp.eq.s32.totalorder %s32, 0
      %p278 = por %p276, %p277
      %s279 = ssub.s32 %s26, %s33
      %p280 = scmp.eq.s32.totalorder %s279, 0
      %s282 = sadd.s32 %s281, 1
      %s283 = scalar_select %p280, %s281, %s282
      %p286 = pneg %p280
      %p287 = scmp.eq.s32.totalorder %s26, 1
      %p288 = por %p286, %p287
      %p289 = scmp.ne.s32.totalorder %s281, %s284
      %p290 = scmp.eq.s32.totalorder %s26, 0
      %p291 = por %p289, %p290
      %p292 = scmp.ne.s32.totalorder %s281, %s284
      %p293 = scmp.eq.s32.totalorder %s31, 1
      %p294 = por %p292, %p293
      %p295 = scmp.ne.s32.totalorder %s284, %s285
      %p296 = scmp.eq.s32.totalorder %s31, 0
      %p297 = por %p295, %p296
      %p298 = scmp.ne.s32.totalorder %s284, %s285
      %p299 = scmp.eq.s32.totalorder %s32, 1
      %p300 = por %p298, %p299
      %p302 = scmp.ne.s32.totalorder %s285, %s301
      %p303 = scmp.eq.s32.totalorder %s32, 0
      %p304 = por %p302, %p303
      %s305 = ssub.s32 %s26, %s33
      %p306 = scmp.eq.s32.totalorder %s305, 0
      %s308 = sadd.s32 %s307, 1
      %s309 = scalar_select %p306, %s307, %s308
      %p312 = pneg %p306
      %p313 = scmp.eq.s32.totalorder %s26, 1
      %p314 = por %p312, %p313
      %p315 = scmp.ne.s32.totalorder %s307, %s310
      %p316 = scmp.eq.s32.totalorder %s26, 0
      %p317 = por %p315, %p316
      %p318 = scmp.ne.s32.totalorder %s307, %s310
      %p319 = scmp.eq.s32.totalorder %s31, 1
      %p320 = por %p318, %p319
      %p321 = scmp.ne.s32.totalorder %s310, %s311
      %p322 = scmp.eq.s32.totalorder %s31, 0
      %p323 = por %p321, %p322
      %p324 = scmp.ne.s32.totalorder %s310, %s311
      %p325 = scmp.eq.s32.totalorder %s32, 1
      %p326 = por %p324, %p325
      %p328 = scmp.ne.s32.totalorder %s311, %s327
      %p329 = scmp.eq.s32.totalorder %s32, 0
      %p330 = por %p328, %p329
      %p331 = scmp.le.s32.totalorder 1, %s26
      %p332 = scmp.lt.s32.totalorder %s26, 3
      %p333 = pnand %p331, %p332
      %p334 = pneg %p333
      // Predicated region
      $region9: #{tpu_custom_call.1} parent=5 // pred_check
        _
      $region10: #{tpu_custom_call.1} parent=5 // pred_check_branch
        %336 = sbr.rel (%p333) target = $region12
      $region11: #{tpu_custom_call.1} parent=5 // pred_region
        %s337 = ssub.s32 %s26, 1
        // Predicated region
        $region13: #{tpu_custom_call.1} parent=11 // pred_check
          %p338 = pneg %p47
        $region14: #{tpu_custom_call.1} parent=11 // pred_check_branch
          %340 = sbr.rel (%p338) target = $region16
        $region15: #{tpu_custom_call.1} parent=11 // pred_region
          %s342 = ssub.s32 64, 64
          %343 = vsyncadd [#allocation3], %s342
          %s345 = sshll.u32 [#allocation2], 4
          %s346 = int_to_ptr.vmem [resolvable:$true] %s345
          %348 = dma.hbm_to_vmem [thread:$0]  %s0, 64, %s346, [#allocation3]
        $region16: #{tpu_custom_call.1} parent=11 // pred_fallthru
          _
        // Predicated region
        $region17: #{tpu_custom_call.1} parent=11 // pred_check
          %p349 = pneg %p68
        $region18: #{tpu_custom_call.1} parent=11 // pred_check_branch
          %351 = sbr.rel (%p349) target = $region20
        $region19: #{tpu_custom_call.1} parent=11 // pred_region
          %s353 = ssub.s32 64, 64
          %354 = vsyncadd [#allocation6], %s353
          %s356 = sshll.u32 [#allocation5], 4
          %s357 = int_to_ptr.vmem [resolvable:$true] %s356
          %359 = dma.hbm_to_vmem [thread:$0]  %s1, 64, %s357, [#allocation6]
        $region20: #{tpu_custom_call.1} parent=11 // pred_fallthru
          _
        // Predicated region
        $region21: #{tpu_custom_call.1} parent=11 // pred_check
          %p360 = pneg %p89
        $region22: #{tpu_custom_call.1} parent=11 // pred_check_branch
          %362 = sbr.rel (%p360) target = $region24
        $region23: #{tpu_custom_call.1} parent=11 // pred_region
          _
        $region24: #{tpu_custom_call.1} parent=11 // pred_fallthru
          _
      $region12: #{tpu_custom_call.1} parent=5 // pred_fallthru
        _
      %p363 = scmp.lt.s32.totalorder %s26, 2
      // Predicated region
      $region25: #{tpu_custom_call.1} parent=5 // pred_check
        %p364 = pneg %p363
      $region26: #{tpu_custom_call.1} parent=5 // pred_check_branch
        %366 = sbr.rel (%p364) target = $region28
      $region27: #{tpu_custom_call.1} parent=5 // pred_region
        // Predicated region
        $region29: #{tpu_custom_call.1} parent=27 // pred_check
          %p367 = pneg %p109
        $region30: #{tpu_custom_call.1} parent=27 // pred_check_branch
          %369 = sbr.rel (%p367) target = $region32
        $region31: #{tpu_custom_call.1} parent=27 // pred_region
          %s370 = sand.u32 %s26, 1
          %s371 = scalar_lea.sflag [#allocation3], %s370
          %s372 = sand.u32 %s99, 1
          %s373 = smul.addr %s372, 256
          %s374 = scalar_lea.vmem [#allocation7], %s373
          %s375 = smul.u32 16, %s26
          %s377 = ssub.s32 4096, 4096
          %378 = vsyncadd %s371, %s377
          %s379 = smul.addr %s375, 2
          %s380 = smul.addr %s379, 128
          %s381 = scalar_lea.hbm %s3, %s380
          %s382 = sshll.u32 %s374, 4
          %s383 = int_to_ptr.vmem [resolvable:$true] %s382
          %388 = dma.hbm_to_vmem [thread:$0]  %s381, 4096, %s383, %s371, 256, 256, 16
        $region32: #{tpu_custom_call.1} parent=27 // pred_fallthru
          _
        // Predicated region
        $region33: #{tpu_custom_call.1} parent=27 // pred_check
          %p389 = pneg %p135
        $region34: #{tpu_custom_call.1} parent=27 // pred_check_branch
          %391 = sbr.rel (%p389) target = $region36
        $region35: #{tpu_custom_call.1} parent=27 // pred_region
          %p392 = scmp.lt.s32.totalorder %s26, 1
          %s393 = scalar_select %p392, %s26, 1
          %s394 = scalar_lea.vmem %s4, %s393
        $region36: #{tpu_custom_call.1} parent=27 // pred_fallthru
          _
        // Predicated region
        $region37: #{tpu_custom_call.1} parent=27 // pred_check
          %p395 = pneg %p161
        $region38: #{tpu_custom_call.1} parent=27 // pred_check_branch
          %397 = sbr.rel (%p395) target = $region40
        $region39: #{tpu_custom_call.1} parent=27 // pred_region
          %s398 = sand.u32 %s26, 1
          %s399 = scalar_lea.sflag [#allocation3], %s398
          %s400 = sand.u32 %s151, 1
          %s401 = smul.addr %s400, 256
          %s402 = scalar_lea.vmem [#allocation8], %s401
          %s403 = smul.u32 16, %s26
          %s405 = ssub.s32 4096, 4096
          %406 = vsyncadd %s399, %s405
          %s407 = smul.addr %s403, 2
          %s408 = smul.addr %s407, 128
          %s409 = scalar_lea.hbm %s5, %s408
          %s410 = sshll.u32 %s402, 4
          %s411 = int_to_ptr.vmem [resolvable:$true] %s410
          %416 = dma.hbm_to_vmem [thread:$0]  %s409, 4096, %s411, %s399, 256, 256, 16
        $region40: #{tpu_custom_call.1} parent=27 // pred_fallthru
          _
        // Predicated region
        $region41: #{tpu_custom_call.1} parent=27 // pred_check
          %p417 = pneg %p187
        $region42: #{tpu_custom_call.1} parent=27 // pred_check_branch
          %419 = sbr.rel (%p417) target = $region44
        $region43: #{tpu_custom_call.1} parent=27 // pred_region
          %p420 = scmp.lt.s32.totalorder %s26, 1
          %s421 = scalar_select %p420, %s26, 1
          %s422 = scalar_lea.vmem %s6, %s421
        $region44: #{tpu_custom_call.1} parent=27 // pred_fallthru
          _
        // Predicated region
        $region45: #{tpu_custom_call.1} parent=27 // pred_check
          %p423 = pneg %p213
        $region46: #{tpu_custom_call.1} parent=27 // pred_check_branch
          %425 = sbr.rel (%p423) target = $region48
        $region47: #{tpu_custom_call.1} parent=27 // pred_region
          %s426 = sand.u32 %s26, 1
          %s427 = scalar_lea.sflag [#allocation3], %s426
          %s428 = sand.u32 %s203, 1
          %s429 = smul.addr %s428, 128
          %s430 = scalar_lea.vmem [#allocation9], %s429
          %s431 = smul.u32 16, %s26
          %s433 = ssub.s32 2048, 2048
          %434 = vsyncadd %s427, %s433
          %s435 = smul.addr %s431, 128
          %s436 = scalar_lea.hbm %s7, %s435
          %s437 = sshll.u32 %s430, 4
          %s438 = int_to_ptr.vmem [resolvable:$true] %s437
          %443 = dma.hbm_to_vmem [thread:$0]  %s436, 2048, %s438, %s427, 128, 128, 8
        $region48: #{tpu_custom_call.1} parent=27 // pred_fallthru
          _
        // Predicated region
        $region49: #{tpu_custom_call.1} parent=27 // pred_check
          %p444 = pneg %p239
        $region50: #{tpu_custom_call.1} parent=27 // pred_check_branch
          %446 = sbr.rel (%p444) target = $region52
        $region51: #{tpu_custom_call.1} parent=27 // pred_region
          %p447 = scmp.lt.s32.totalorder %s26, 1
          %s448 = scalar_select %p447, %s26, 1
          %s449 = scalar_lea.vmem %s8, %s448
        $region52: #{tpu_custom_call.1} parent=27 // pred_fallthru
          _
      $region28: #{tpu_custom_call.1} parent=5 // pred_fallthru
        _
      %p450 = scmp.le.s32.totalorder 1, %s26
      %p451 = scmp.lt.s32.totalorder %s26, 3
      %p452 = pnand %p450, %p451
      %p453 = pneg %p452
      // Predicated region
      $region53: #{tpu_custom_call.1} parent=5 // pred_check
        _
      $region54: #{tpu_custom_call.1} parent=5 // pred_check_branch
        %455 = sbr.rel (%p452) target = $region56
      $region55: #{tpu_custom_call.1} parent=5 // pred_region
        %s456 = ssub.s32 %s26, 1
        // Predicated region
        $region57: #{tpu_custom_call.1} parent=55 // pred_check
          %p457 = pneg %p47
        $region58: #{tpu_custom_call.1} parent=55 // pred_check_branch
          %459 = sbr.rel (%p457) target = $region60
        $region59: #{tpu_custom_call.1} parent=55 // pred_region
          %460 = dma.done [#allocation3], 64
        $region60: #{tpu_custom_call.1} parent=55 // pred_fallthru
          _
        // Predicated region
        $region61: #{tpu_custom_call.1} parent=55 // pred_check
          %p461 = pneg %p68
        $region62: #{tpu_custom_call.1} parent=55 // pred_check_branch
          %463 = sbr.rel (%p461) target = $region64
        $region63: #{tpu_custom_call.1} parent=55 // pred_region
          %464 = dma.done [#allocation6], 64
        $region64: #{tpu_custom_call.1} parent=55 // pred_fallthru
          _
        %s465 = sand.u32 %s31, 1
        %s466 = scalar_lea.sflag [#allocation3], %s465
        %s467 = sand.u32 %s102, 1
        %s468 = smul.addr %s467, 256
        %s469 = scalar_lea.vmem [#allocation7], %s468
        // Predicated region
        $region65: #{tpu_custom_call.1} parent=55 // pred_check
          %p470 = pneg %p115
        $region66: #{tpu_custom_call.1} parent=55 // pred_check_branch
          %472 = sbr.rel (%p470) target = $region68
        $region67: #{tpu_custom_call.1} parent=55 // pred_region
          %473 = dma.done %s466, 4096
        $region68: #{tpu_custom_call.1} parent=55 // pred_fallthru
          _
        %s474 = sand.u32 %s31, 1
        %s475 = scalar_lea.sflag [#allocation3], %s474
        %s476 = sand.u32 %s154, 1
        %s477 = smul.addr %s476, 256
        %s478 = scalar_lea.vmem [#allocation8], %s477
        // Predicated region
        $region69: #{tpu_custom_call.1} parent=55 // pred_check
          %p479 = pneg %p167
        $region70: #{tpu_custom_call.1} parent=55 // pred_check_branch
          %481 = sbr.rel (%p479) target = $region72
        $region71: #{tpu_custom_call.1} parent=55 // pred_region
          %482 = dma.done %s475, 4096
        $region72: #{tpu_custom_call.1} parent=55 // pred_fallthru
          _
        %s483 = sand.u32 %s31, 1
        %s484 = scalar_lea.sflag [#allocation3], %s483
        %s485 = sand.u32 %s206, 1
        %s486 = smul.addr %s485, 128
        %s487 = scalar_lea.vmem [#allocation9], %s486
        // Predicated region
        $region73: #{tpu_custom_call.1} parent=55 // pred_check
          %p488 = pneg %p219
        $region74: #{tpu_custom_call.1} parent=55 // pred_check_branch
          %490 = sbr.rel (%p488) target = $region76
        $region75: #{tpu_custom_call.1} parent=55 // pred_region
          %491 = dma.done %s484, 2048
        $region76: #{tpu_custom_call.1} parent=55 // pred_fallthru
          _
        %p492 = pneg %p47
        %p493 = pneg %p44
        %p494 = pneg %p68
        %p495 = pneg %p65
        %p496 = pneg %p89
        %p497 = pneg %p86
        %s498 = sand.u32 %s31, 1
        %s499 = scalar_lea.sflag [#allocation3], %s498
        %s500 = sand.u32 %s102, 1
        %s501 = smul.addr %s500, 256
        %s502 = scalar_lea.vmem [#allocation7], %s501
        %p503 = pneg %p115
        %p504 = pneg %p112
        %p505 = scmp.lt.s32.totalorder %s31, 1
        %s506 = scalar_select %p505, %s31, 1
        %s507 = scalar_lea.vmem %s4, %s506
        %p508 = pneg %p141
        %p509 = pneg %p138
        %s510 = sand.u32 %s31, 1
        %s511 = scalar_lea.sflag [#allocation3], %s510
        %s512 = sand.u32 %s154, 1
        %s513 = smul.addr %s512, 256
        %s514 = scalar_lea.vmem [#allocation8], %s513
        %p515 = pneg %p167
        %p516 = pneg %p164
        %p517 = scmp.lt.s32.totalorder %s31, 1
        %s518 = scalar_select %p517, %s31, 1
        %s519 = scalar_lea.vmem %s6, %s518
        %p520 = pneg %p193
        %p521 = pneg %p190
        %s522 = sand.u32 %s31, 1
        %s523 = scalar_lea.sflag [#allocation3], %s522
        %s524 = sand.u32 %s206, 1
        %s525 = smul.addr %s524, 128
        %s526 = scalar_lea.vmem [#allocation9], %s525
        %p527 = pneg %p219
        %p528 = pneg %p216
        %p529 = scmp.lt.s32.totalorder %s31, 1
        %s530 = scalar_select %p529, %s31, 1
        %s531 = scalar_lea.vmem %s8, %s530
        %p532 = pneg %p245
        %p533 = pneg %p242
        %p534 = pneg %p271
        %p535 = pneg %p268
        %s536 = sand.u32 %s258, 1
        %s537 = scalar_lea.sflag [#allocation4], %s536
        %s538 = sand.u32 %s258, 1
        %s539 = smul.addr %s538, 2
        %s540 = scalar_lea.vmem [#allocation10], %s539
        %p541 = pneg %p297
        %p542 = pneg %p294
        %s543 = sand.u32 %s31, 1
        %s544 = scalar_lea.sflag [#allocation12], %s543
        %s545 = sand.u32 %s284, 1
        %s546 = smul.addr %s545, 2
        %s547 = scalar_lea.vmem [#allocation11], %s546
        %p548 = pneg %p323
        %p549 = pneg %p320
        %s550 = sand.u32 %s31, 1
        %s551 = scalar_lea.sflag [#allocation12], %s550
        %s552 = sand.u32 %s310, 1
        %s553 = smul.addr %s552, 2
        %s554 = scalar_lea.vmem [#allocation13], %s553
        %s555 = smul.u32 16, %s31
        %p556 = scmp.lt.s32.totalorder %s31, 1
        %s557 = scalar_select %p556, %s31, 1
        %s558 = scalar_lea.vmem %s4, %s557
        %s559 = smul.u32 16, %s31
        %p560 = scmp.lt.s32.totalorder %s31, 1
        %s561 = scalar_select %p560, %s31, 1
        %s562 = scalar_lea.vmem %s6, %s561
        %s563 = smul.u32 16, %s31
        %p564 = scmp.lt.s32.totalorder %s31, 1
        %s565 = scalar_select %p564, %s31, 1
        %s566 = scalar_lea.vmem %s8, %s565
        %v567 = vld [vmem:[#allocation2] sm:$0xf]
        %v568 = vld [vmem:[%s469] sm:$0xff]
        %v569 = vld [vmem:[%s469 + $0x8] sm:$0xff]
        %v570 = vld [vmem:[%s469 + $0x10] sm:$0xff]
        %v571 = vld [vmem:[%s469 + $0x18] sm:$0xff]
        %v572 = vld [vmem:[%s469 + $0x20] sm:$0xff]
        %v573 = vld [vmem:[%s469 + $0x28] sm:$0xff]
        %v574 = vld [vmem:[%s469 + $0x30] sm:$0xff]
        %v575 = vld [vmem:[%s469 + $0x38] sm:$0xff]
        %v576 = vld [vmem:[%s469 + $0x40] sm:$0xff]
        %v577 = vld [vmem:[%s469 + $0x48] sm:$0xff]
        %v578 = vld [vmem:[%s469 + $0x50] sm:$0xff]
        %v579 = vld [vmem:[%s469 + $0x58] sm:$0xff]
        %v580 = vld [vmem:[%s469 + $0x60] sm:$0xff]
        %v581 = vld [vmem:[%s469 + $0x68] sm:$0xff]
        %v582 = vld [vmem:[%s469 + $0x70] sm:$0xff]
        %v583 = vld [vmem:[%s469 + $0x78] sm:$0xff]
        %v584 = vld [vmem:[%s469 + $0x80] sm:$0xff]
        %v585 = vld [vmem:[%s469 + $0x88] sm:$0xff]
        %v586 = vld [vmem:[%s469 + $0x90] sm:$0xff]
        %v587 = vld [vmem:[%s469 + $0x98] sm:$0xff]
        %v588 = vld [vmem:[%s469 + $0xa0] sm:$0xff]
        %v589 = vld [vmem:[%s469 + $0xa8] sm:$0xff]
        %v590 = vld [vmem:[%s469 + $0xb0] sm:$0xff]
        %v591 = vld [vmem:[%s469 + $0xb8] sm:$0xff]
        %v592 = vld [vmem:[%s469 + $0xc0] sm:$0xff]
        %v593 = vld [vmem:[%s469 + $0xc8] sm:$0xff]
        %v594 = vld [vmem:[%s469 + $0xd0] sm:$0xff]
        %v595 = vld [vmem:[%s469 + $0xd8] sm:$0xff]
        %v596 = vld [vmem:[%s469 + $0xe0] sm:$0xff]
        %v597 = vld [vmem:[%s469 + $0xe8] sm:$0xff]
        %v598 = vld [vmem:[%s469 + $0xf0] sm:$0xff]
        %v599 = vld [vmem:[%s469 + $0xf8] sm:$0xff]
        %v600 = vld [vmem:[%s558] sm:$0x1]
        %v602 = vlaneseq
        %v603 = vshrl.u32 %v602, 7
        %v604 = vsub.s32 0, %v603
        %v605 = vrot.slane %v600, %v604
        %v609 = vunpack.c.l.s4 1983009808
        %v610 = vunpack.c.0.s8 %v609
        %v611 = vlaneseq
        %v612 = vshrl.u32 %v611, 7
        %v613 = vsub.s32 %v610, %v612
        %v614 = vrot.slane %v567, %v613
        %v615 = vcombine.high %v614, %v614
        %618 = vmatprep.subr.mxu0 %v569
        %619 = vmatpush1.xpose.msra.mxu0 %v568
        %620 = vmatprep.subr.mxu0 %v571
        %621 = vmatpush1.xpose.msra.mxu0 %v570
        %622 = vmatprep.subr.mxu0 %v573
        %623 = vmatpush1.xpose.msra.mxu0 %v572
        %624 = vmatprep.subr.mxu0 %v575
        %625 = vmatpush1.xpose.msra.mxu0 %v574
        %626 = vmatprep.subr.mxu0 %v577
        %627 = vmatpush1.xpose.msra.mxu0 %v576
        %628 = vmatprep.subr.mxu0 %v579
        %629 = vmatpush1.xpose.msra.mxu0 %v578
        %630 = vmatprep.subr.mxu0 %v581
        %631 = vmatpush1.xpose.msra.mxu0 %v580
        %632 = vmatprep.subr.mxu0 %v583
        %633 = vmatpush1.xpose.msra.mxu0 %v582
        %634 = vmatprep.subr.mxu0 %v585
        %635 = vmatpush1.xpose.msra.mxu0 %v584
        %636 = vmatprep.subr.mxu0 %v587
        %637 = vmatpush1.xpose.msra.mxu0 %v586
        %638 = vmatprep.subr.mxu0 %v589
        %639 = vmatpush1.xpose.msra.mxu0 %v588
        %640 = vmatprep.subr.mxu0 %v591
        %641 = vmatpush1.xpose.msra.mxu0 %v590
        %642 = vmatprep.subr.mxu0 %v593
        %643 = vmatpush1.xpose.msra.mxu0 %v592
        %644 = vmatprep.subr.mxu0 %v595
        %645 = vmatpush1.xpose.msra.mxu0 %v594
        %646 = vmatprep.subr.mxu0 %v597
        %647 = vmatpush1.xpose.msra.mxu0 %v596
        %648 = vmatprep.subr.mxu0 %v599
        %649 = vmatpush1.xpose.msra.mxu0 %v598
        %650 = vmatprep.subr.mxu0 0.0
        %651 = vmatpush1.xpose.msra.mxu0 0.0
        %652 = vmatprep.subr.mxu0 0.0
        %653 = vmatpush1.xpose.msra.mxu0 0.0
        %654 = vmatprep.subr.mxu0 0.0
        %655 = vmatpush1.xpose.msra.mxu0 0.0
        %656 = vmatprep.subr.mxu0 0.0
        %657 = vmatpush1.xpose.msra.mxu0 0.0
        %658 = vmatprep.subr.mxu0 0.0
        %659 = vmatpush1.xpose.msra.mxu0 0.0
        %660 = vmatprep.subr.mxu0 0.0
        %661 = vmatpush1.xpose.msra.mxu0 0.0
        %662 = vmatprep.subr.mxu0 0.0
        %663 = vmatpush1.xpose.msra.mxu0 0.0
        %664 = vmatprep.subr.mxu0 0.0
        %665 = vmatpush1.xpose.msra.mxu0 0.0
        %666 = vmatprep.subr.mxu0 0.0
        %667 = vmatpush1.xpose.msra.mxu0 0.0
        %668 = vmatprep.subr.mxu0 0.0
        %669 = vmatpush1.xpose.msra.mxu0 0.0
        %670 = vmatprep.subr.mxu0 0.0
        %671 = vmatpush1.xpose.msra.mxu0 0.0
        %672 = vmatprep.subr.mxu0 0.0
        %673 = vmatpush1.xpose.msra.mxu0 0.0
        %674 = vmatprep.subr.mxu0 0.0
        %675 = vmatpush1.xpose.msra.mxu0 0.0
        %676 = vmatprep.subr.mxu0 0.0
        %677 = vmatpush1.xpose.msra.mxu0 0.0
        %678 = vmatprep.subr.mxu0 0.0
        %679 = vmatpush1.xpose.msra.mxu0 0.0
        %680 = vmatprep.subr.mxu0 0.0
        %681 = vmatpush1.xpose.msra.mxu0 0.0
        %682 = vmatprep.mubr.f32.mxu0 %v615
        %683 = vmatmul.mubr.f32.gmra.mrb[0].mxu0 %v614
        %v684 = vpop.f32.mrb[0].mxu0
        %v685 = vadd.f32 %v605, %v684
        %v686 = vpop.f32.mrb[0].mxu0
        %687 = vdwg.mxu0
        %v688 = vsub.f32 0.0, %v685
        %v689 = vmul.f32 %v688, 1.442695
        %v690 = vpow.pop %v689
        %v691 = vadd.f32 %v690, 1.0
        %v692 = vrcp.pop %v691
        %v693 = vmul.f32 1.0, %v692
        %v694 = vmul.f32 %v685, %v693
        %695 = vst [vmem:[%s540] sm:$0x3] %v694
        %v696 = vld [vmem:[#allocation5] sm:$0xf]
        %v697 = vld [vmem:[%s478] sm:$0xff]
        %v698 = vld [vmem:[%s478 + $0x8] sm:$0xff]
        %v699 = vld [vmem:[%s478 + $0x10] sm:$0xff]
        %v700 = vld [vmem:[%s478 + $0x18] sm:$0xff]
        %v701 = vld [vmem:[%s478 + $0x20] sm:$0xff]
        %v702 = vld [vmem:[%s478 + $0x28] sm:$0xff]
        %v703 = vld [vmem:[%s478 + $0x30] sm:$0xff]
        %v704 = vld [vmem:[%s478 + $0x38] sm:$0xff]
        %v705 = vld [vmem:[%s478 + $0x40] sm:$0xff]
        %v706 = vld [vmem:[%s478 + $0x48] sm:$0xff]
        %v707 = vld [vmem:[%s478 + $0x50] sm:$0xff]
        %v708 = vld [vmem:[%s478 + $0x58] sm:$0xff]
        %v709 = vld [vmem:[%s478 + $0x60] sm:$0xff]
        %v710 = vld [vmem:[%s478 + $0x68] sm:$0xff]
        %v711 = vld [vmem:[%s478 + $0x70] sm:$0xff]
        %v712 = vld [vmem:[%s478 + $0x78] sm:$0xff]
        %v713 = vld [vmem:[%s478 + $0x80] sm:$0xff]
        %v714 = vld [vmem:[%s478 + $0x88] sm:$0xff]
        %v715 = vld [vmem:[%s478 + $0x90] sm:$0xff]
        %v716 = vld [vmem:[%s478 + $0x98] sm:$0xff]
        %v717 = vld [vmem:[%s478 + $0xa0] sm:$0xff]
        %v718 = vld [vmem:[%s478 + $0xa8] sm:$0xff]
        %v719 = vld [vmem:[%s478 + $0xb0] sm:$0xff]
        %v720 = vld [vmem:[%s478 + $0xb8] sm:$0xff]
        %v721 = vld [vmem:[%s478 + $0xc0] sm:$0xff]
        %v722 = vld [vmem:[%s478 + $0xc8] sm:$0xff]
        %v723 = vld [vmem:[%s478 + $0xd0] sm:$0xff]
        %v724 = vld [vmem:[%s478 + $0xd8] sm:$0xff]
        %v725 = vld [vmem:[%s478 + $0xe0] sm:$0xff]
        %v726 = vld [vmem:[%s478 + $0xe8] sm:$0xff]
        %v727 = vld [vmem:[%s478 + $0xf0] sm:$0xff]
        %v728 = vld [vmem:[%s478 + $0xf8] sm:$0xff]
        %v729 = vld [vmem:[%s562] sm:$0x1]
        %v731 = vlaneseq
        %v732 = vshrl.u32 %v731, 7
        %v733 = vsub.s32 0, %v732
        %v734 = vrot.slane %v729, %v733
        %v738 = vunpack.c.l.s4 1983009808
        %v739 = vunpack.c.0.s8 %v738
        %v740 = vlaneseq
        %v741 = vshrl.u32 %v740, 7
        %v742 = vsub.s32 %v739, %v741
        %v743 = vrot.slane %v696, %v742
        %v744 = vcombine.high %v743, %v743
        %747 = vmatprep.subr.mxu0 %v698
        %748 = vmatpush1.xpose.msra.mxu0 %v697
        %749 = vmatprep.subr.mxu0 %v700
        %750 = vmatpush1.xpose.msra.mxu0 %v699
        %751 = vmatprep.subr.mxu0 %v702
        %752 = vmatpush1.xpose.msra.mxu0 %v701
        %753 = vmatprep.subr.mxu0 %v704
        %754 = vmatpush1.xpose.msra.mxu0 %v703
        %755 = vmatprep.subr.mxu0 %v706
        %756 = vmatpush1.xpose.msra.mxu0 %v705
        %757 = vmatprep.subr.mxu0 %v708
        %758 = vmatpush1.xpose.msra.mxu0 %v707
        %759 = vmatprep.subr.mxu0 %v710
        %760 = vmatpush1.xpose.msra.mxu0 %v709
        %761 = vmatprep.subr.mxu0 %v712
        %762 = vmatpush1.xpose.msra.mxu0 %v711
        %763 = vmatprep.subr.mxu0 %v714
        %764 = vmatpush1.xpose.msra.mxu0 %v713
        %765 = vmatprep.subr.mxu0 %v716
        %766 = vmatpush1.xpose.msra.mxu0 %v715
        %767 = vmatprep.subr.mxu0 %v718
        %768 = vmatpush1.xpose.msra.mxu0 %v717
        %769 = vmatprep.subr.mxu0 %v720
        %770 = vmatpush1.xpose.msra.mxu0 %v719
        %771 = vmatprep.subr.mxu0 %v722
        %772 = vmatpush1.xpose.msra.mxu0 %v721
        %773 = vmatprep.subr.mxu0 %v724
        %774 = vmatpush1.xpose.msra.mxu0 %v723
        %775 = vmatprep.subr.mxu0 %v726
        %776 = vmatpush1.xpose.msra.mxu0 %v725
        %777 = vmatprep.subr.mxu0 %v728
        %778 = vmatpush1.xpose.msra.mxu0 %v727
        %779 = vmatprep.subr.mxu0 0.0
        %780 = vmatpush1.xpose.msra.mxu0 0.0
        %781 = vmatprep.subr.mxu0 0.0
        %782 = vmatpush1.xpose.msra.mxu0 0.0
        %783 = vmatprep.subr.mxu0 0.0
        %784 = vmatpush1.xpose.msra.mxu0 0.0
        %785 = vmatprep.subr.mxu0 0.0
        %786 = vmatpush1.xpose.msra.mxu0 0.0
        %787 = vmatprep.subr.mxu0 0.0
        %788 = vmatpush1.xpose.msra.mxu0 0.0
        %789 = vmatprep.subr.mxu0 0.0
        %790 = vmatpush1.xpose.msra.mxu0 0.0
        %791 = vmatprep.subr.mxu0 0.0
        %792 = vmatpush1.xpose.msra.mxu0 0.0
        %793 = vmatprep.subr.mxu0 0.0
        %794 = vmatpush1.xpose.msra.mxu0 0.0
        %795 = vmatprep.subr.mxu0 0.0
        %796 = vmatpush1.xpose.msra.mxu0 0.0
        %797 = vmatprep.subr.mxu0 0.0
        %798 = vmatpush1.xpose.msra.mxu0 0.0
        %799 = vmatprep.subr.mxu0 0.0
        %800 = vmatpush1.xpose.msra.mxu0 0.0
        %801 = vmatprep.subr.mxu0 0.0
        %802 = vmatpush1.xpose.msra.mxu0 0.0
        %803 = vmatprep.subr.mxu0 0.0
        %804 = vmatpush1.xpose.msra.mxu0 0.0
        %805 = vmatprep.subr.mxu0 0.0
        %806 = vmatpush1.xpose.msra.mxu0 0.0
        %807 = vmatprep.subr.mxu0 0.0
        %808 = vmatpush1.xpose.msra.mxu0 0.0
        %809 = vmatprep.subr.mxu0 0.0
        %810 = vmatpush1.xpose.msra.mxu0 0.0
        %811 = vmatprep.mubr.f32.mxu0 %v744
        %812 = vmatmul.mubr.f32.gmra.mrb[0].mxu0 %v743
        %v813 = vpop.f32.mrb[0].mxu0
        %v814 = vadd.f32 %v734, %v813
        %v815 = vpop.f32.mrb[0].mxu0
        %816 = vdwg.mxu0
        %v817 = vsub.f32 0.0, %v814
        %v818 = vmul.f32 %v817, 1.442695
        %v819 = vpow.pop %v818
        %v820 = vadd.f32 %v819, 1.0
        %v821 = vrcp.pop %v820
        %v822 = vmul.f32 1.0, %v821
        %v823 = vmul.f32 %v814, %v822
        %824 = vst [vmem:[%s547] sm:$0x3] %v823
        %v825 = vld [vmem:[%s2] sm:$0x3]
        %v826 = vld [vmem:[%s487] sm:$0xff]
        %v827 = vld [vmem:[%s487 + $0x8] sm:$0xff]
        %v828 = vld [vmem:[%s487 + $0x10] sm:$0xff]
        %v829 = vld [vmem:[%s487 + $0x18] sm:$0xff]
        %v830 = vld [vmem:[%s487 + $0x20] sm:$0xff]
        %v831 = vld [vmem:[%s487 + $0x28] sm:$0xff]
        %v832 = vld [vmem:[%s487 + $0x30] sm:$0xff]
        %v833 = vld [vmem:[%s487 + $0x38] sm:$0xff]
        %v834 = vld [vmem:[%s487 + $0x40] sm:$0xff]
        %v835 = vld [vmem:[%s487 + $0x48] sm:$0xff]
        %v836 = vld [vmem:[%s487 + $0x50] sm:$0xff]
        %v837 = vld [vmem:[%s487 + $0x58] sm:$0xff]
        %v838 = vld [vmem:[%s487 + $0x60] sm:$0xff]
        %v839 = vld [vmem:[%s487 + $0x68] sm:$0xff]
        %v840 = vld [vmem:[%s487 + $0x70] sm:$0xff]
        %v841 = vld [vmem:[%s487 + $0x78] sm:$0xff]
        %v842 = vld [vmem:[%s566] sm:$0x1]
        %v844 = vlaneseq
        %v845 = vshrl.u32 %v844, 7
        %v846 = vsub.s32 0, %v845
        %v847 = vrot.slane %v842, %v846
        %849 = vmatprep.subr.mxu0 0.0
        %850 = vmatpush1.xpose.msra.mxu0 %v826
        %851 = vmatprep.subr.mxu0 0.0
        %852 = vmatpush1.xpose.msra.mxu0 %v827
        %853 = vmatprep.subr.mxu0 0.0
        %854 = vmatpush1.xpose.msra.mxu0 %v828
        %855 = vmatprep.subr.mxu0 0.0
        %856 = vmatpush1.xpose.msra.mxu0 %v829
        %857 = vmatprep.subr.mxu0 0.0
        %858 = vmatpush1.xpose.msra.mxu0 %v830
        %859 = vmatprep.subr.mxu0 0.0
        %860 = vmatpush1.xpose.msra.mxu0 %v831
        %861 = vmatprep.subr.mxu0 0.0
        %862 = vmatpush1.xpose.msra.mxu0 %v832
        %863 = vmatprep.subr.mxu0 0.0
        %864 = vmatpush1.xpose.msra.mxu0 %v833
        %865 = vmatprep.subr.mxu0 0.0
        %866 = vmatpush1.xpose.msra.mxu0 %v834
        %867 = vmatprep.subr.mxu0 0.0
        %868 = vmatpush1.xpose.msra.mxu0 %v835
        %869 = vmatprep.subr.mxu0 0.0
        %870 = vmatpush1.xpose.msra.mxu0 %v836
        %871 = vmatprep.subr.mxu0 0.0
        %872 = vmatpush1.xpose.msra.mxu0 %v837
        %873 = vmatprep.subr.mxu0 0.0
        %874 = vmatpush1.xpose.msra.mxu0 %v838
        %875 = vmatprep.subr.mxu0 0.0
        %876 = vmatpush1.xpose.msra.mxu0 %v839
        %877 = vmatprep.subr.mxu0 0.0
        %878 = vmatpush1.xpose.msra.mxu0 %v840
        %879 = vmatprep.subr.mxu0 0.0
        %880 = vmatpush1.xpose.msra.mxu0 %v841
        %881 = vmatprep.subr.mxu0 0.0
        %882 = vmatpush1.xpose.msra.mxu0 0.0
        %883 = vmatprep.subr.mxu0 0.0
        %884 = vmatpush1.xpose.msra.mxu0 0.0
        %885 = vmatprep.subr.mxu0 0.0
        %886 = vmatpush1.xpose.msra.mxu0 0.0
        %887 = vmatprep.subr.mxu0 0.0
        %888 = vmatpush1.xpose.msra.mxu0 0.0
        %889 = vmatprep.subr.mxu0 0.0
        %890 = vmatpush1.xpose.msra.mxu0 0.0
        %891 = vmatprep.subr.mxu0 0.0
        %892 = vmatpush1.xpose.msra.mxu0 0.0
        %893 = vmatprep.subr.mxu0 0.0
        %894 = vmatpush1.xpose.msra.mxu0 0.0
        %895 = vmatprep.subr.mxu0 0.0
        %896 = vmatpush1.xpose.msra.mxu0 0.0
        %897 = vmatprep.subr.mxu0 0.0
        %898 = vmatpush1.xpose.msra.mxu0 0.0
        %899 = vmatprep.subr.mxu0 0.0
        %900 = vmatpush1.xpose.msra.mxu0 0.0
        %901 = vmatprep.subr.mxu0 0.0
        %902 = vmatpush1.xpose.msra.mxu0 0.0
        %903 = vmatprep.subr.mxu0 0.0
        %904 = vmatpush1.xpose.msra.mxu0 0.0
        %905 = vmatprep.subr.mxu0 0.0
        %906 = vmatpush1.xpose.msra.mxu0 0.0
        %907 = vmatprep.subr.mxu0 0.0
        %908 = vmatpush1.xpose.msra.mxu0 0.0
        %909 = vmatprep.subr.mxu0 0.0
        %910 = vmatpush1.xpose.msra.mxu0 0.0
        %911 = vmatprep.subr.mxu0 0.0
        %912 = vmatpush1.xpose.msra.mxu0 0.0
        %913 = vmatprep.mubr.f32.mxu0 0.0
        %914 = vmatmul.mubr.f32.gmra.mrb[0].mxu0 %v825
        %v915 = vpop.f32.mrb[0].mxu0
        %v916 = vadd.f32 %v847, %v915
        %v917 = vpop.f32.mrb[0].mxu0
        %918 = vdwg.mxu0
        %v919 = vsub.f32 0.0, %v916
        %v920 = vmul.f32 %v919, 1.442695
        %v921 = vpow.pop %v920
        %v922 = vadd.f32 %v921, 1.0
        %v923 = vrcp.pop %v922
        %v924 = vmul.f32 1.0, %v923
        %v925 = vmul.f32 %v916, %v924
        %926 = vst [vmem:[%s554] sm:$0x3] %v925
        %s927 = sand.u32 %s258, 1
        %s928 = scalar_lea.sflag [#allocation4], %s927
        %s929 = sand.u32 %s258, 1
        %s930 = smul.addr %s929, 2
        %s931 = scalar_lea.vmem [#allocation10], %s930
        %s932 = sand.u32 %s31, 1
        %s933 = scalar_lea.sflag [#allocation12], %s932
        %s934 = sand.u32 %s284, 1
        %s935 = smul.addr %s934, 2
        %s936 = scalar_lea.vmem [#allocation11], %s935
        %s937 = sand.u32 %s31, 1
        %s938 = scalar_lea.sflag [#allocation12], %s937
        %s939 = sand.u32 %s310, 1
        %s940 = smul.addr %s939, 2
        %s941 = scalar_lea.vmem [#allocation13], %s940
        // Predicated region
        $region77: #{tpu_custom_call.1} parent=55 // pred_check
          %p942 = pneg %p268
        $region78: #{tpu_custom_call.1} parent=55 // pred_check_branch
          %944 = sbr.rel (%p942) target = $region80
        $region79: #{tpu_custom_call.1} parent=55 // pred_region
          %s946 = ssub.s32 32, 32
          %947 = vsyncadd %s928, %s946
          %s948 = smul.addr %s31, 32
          %s949 = scalar_lea.hbm %s9, %s948
          %s951 = sshll.u32 %s931, 4
          %s952 = int_to_ptr.vmem [resolvable:$true] %s951
          %954 = dma.vmem_to_hbm [thread:$0]  %s952, 32, %s949, %s928
        $region80: #{tpu_custom_call.1} parent=55 // pred_fallthru
          _
        // Predicated region
        $region81: #{tpu_custom_call.1} parent=55 // pred_check
          %p955 = pneg %p294
        $region82: #{tpu_custom_call.1} parent=55 // pred_check_branch
          %957 = sbr.rel (%p955) target = $region84
        $region83: #{tpu_custom_call.1} parent=55 // pred_region
          %s959 = ssub.s32 32, 32
          %960 = vsyncadd %s933, %s959
          %s961 = smul.addr %s31, 32
          %s962 = scalar_lea.hbm %s10, %s961
          %s964 = sshll.u32 %s936, 4
          %s965 = int_to_ptr.vmem [resolvable:$true] %s964
          %967 = dma.vmem_to_hbm [thread:$0]  %s965, 32, %s962, %s933
        $region84: #{tpu_custom_call.1} parent=55 // pred_fallthru
          _
        // Predicated region
        $region85: #{tpu_custom_call.1} parent=55 // pred_check
          %p968 = pneg %p320
        $region86: #{tpu_custom_call.1} parent=55 // pred_check_branch
          %970 = sbr.rel (%p968) target = $region88
        $region87: #{tpu_custom_call.1} parent=55 // pred_region
          %s972 = ssub.s32 32, 32
          %973 = vsyncadd %s938, %s972
          %s974 = smul.addr %s31, 32
          %s975 = scalar_lea.hbm %s11, %s974
          %s977 = sshll.u32 %s941, 4
          %s978 = int_to_ptr.vmem [resolvable:$true] %s977
          %980 = dma.vmem_to_hbm [thread:$0]  %s978, 32, %s975, %s938
        $region88: #{tpu_custom_call.1} parent=55 // pred_fallthru
          _
      $region56: #{tpu_custom_call.1} parent=5 // pred_fallthru
        _
      %p981 = scmp.le.s32.totalorder 2, %s26
      // Predicated region
      $region89: #{tpu_custom_call.1} parent=5 // pred_check
        %p982 = pneg %p981
      $region90: #{tpu_custom_call.1} parent=5 // pred_check_branch
        %984 = sbr.rel (%p982) target = $region92
      $region91: #{tpu_custom_call.1} parent=5 // pred_region
        %s985 = ssub.s32 %s26, 2
        // Predicated region
        $region93: #{tpu_custom_call.1} parent=91 // pred_check
          %p986 = pneg %p274
        $region94: #{tpu_custom_call.1} parent=91 // pred_check_branch
          %988 = sbr.rel (%p986) target = $region96
        $region95: #{tpu_custom_call.1} parent=91 // pred_region
          %s989 = sand.u32 %s259, 1
          %s990 = scalar_lea.sflag [#allocation4], %s989
          %s991 = sand.u32 %s259, 1
          %s992 = smul.addr %s991, 2
          %s993 = scalar_lea.vmem [#allocation10], %s992
          %994 = dma.done %s990, 32
        $region96: #{tpu_custom_call.1} parent=91 // pred_fallthru
          _
        // Predicated region
        $region97: #{tpu_custom_call.1} parent=91 // pred_check
          %p995 = pneg %p300
        $region98: #{tpu_custom_call.1} parent=91 // pred_check_branch
          %997 = sbr.rel (%p995) target = $region100
        $region99: #{tpu_custom_call.1} parent=91 // pred_region
          %s998 = sand.u32 %s32, 1
          %s999 = scalar_lea.sflag [#allocation12], %s998
          %s1000 = sand.u32 %s285, 1
          %s1001 = smul.addr %s1000, 2
          %s1002 = scalar_lea.vmem [#allocation11], %s1001
          %1003 = dma.done %s999, 32
        $region100: #{tpu_custom_call.1} parent=91 // pred_fallthru
          _
        // Predicated region
        $region101: #{tpu_custom_call.1} parent=91 // pred_check
          %p1004 = pneg %p326
        $region102: #{tpu_custom_call.1} parent=91 // pred_check_branch
          %1006 = sbr.rel (%p1004) target = $region104
        $region103: #{tpu_custom_call.1} parent=91 // pred_region
          %s1007 = sand.u32 %s32, 1
          %s1008 = scalar_lea.sflag [#allocation12], %s1007
          %s1009 = sand.u32 %s311, 1
          %s1010 = smul.addr %s1009, 2
          %s1011 = scalar_lea.vmem [#allocation13], %s1010
          %1012 = dma.done %s1008, 32
        $region104: #{tpu_custom_call.1} parent=91 // pred_fallthru
          _
      $region92: #{tpu_custom_call.1} parent=5 // pred_fallthru
        _
    $region6: #{tpu_custom_call.1} parent=1 // loop_footer
      %s30 = sadd.s32 1, %s26
    $region7: #{tpu_custom_call.1} parent=1 // loop_footer_branch
      %25 = sbr.rel target = $region3
    $region8: #{tpu_custom_call.1} parent=1 // loop_exit
      _
    %1013 = vsyncpa [#allocation3], 1
    %s1014 = scalar_lea.sflag [#allocation3], 1
    %1015 = vsyncpa %s1014, 1
    %1016 = vsyncpa [#allocation6], 1
    %1017 = vsyncpa [#allocation4], 1
    %s1018 = scalar_lea.sflag [#allocation4], 1
    %1019 = vsyncpa %s1018, 1
    %1020 = vsyncpa [#allocation12], 1
    %s1021 = scalar_lea.sflag [#allocation12], 1
    %1022 = vsyncpa %s1021, 1

</llo_original>
